<compile_context>
chip_gen: v7x
topology: tpu7x:2x2x1
jax: 0.10.0
libtpu: 0.0.40
codegen_flags: <defaults>
</compile_context>

<pallas_src>
import functools

import jax
import jax.numpy as jnp
from jax import lax
from jax.experimental import pallas as pl
from jax.experimental.pallas import tpu as pltpu


def _round_up(n, m):
    return ((n + m - 1) // m) * m


def _pad2(a, rows, cols, dtype, row_off=0, col_off=0):
    """Zero-pad a 2D array into a (rows, cols) canvas, top-left corner at (row_off, col_off)."""
    a = a.astype(dtype)
    return jnp.pad(a, ((row_off, rows - a.shape[0] - row_off),
                       (col_off, cols - a.shape[1] - col_off)))


def concept_encoder_kernel(
    x_ref,
    w1_ref, b1_ref,   # backbone layer 1: x_dim -> hidden   (+ReLU)
    w2_ref, b2_ref,   # backbone layer 2: hidden -> hidden  (+ReLU)
    w3_ref, b3_ref,   # backbone head   : hidden -> c_embed (no act), cols [0, c_embed)
    w4_ref, b4_ref,   # linear_2concept layer 1: c_embed -> c_embed (+ReLU)
    w5_ref, b5_ref,   # linear_2concept head   : c_embed -> yc_dim, columns shifted to
                      #                          [c_embed, c_embed+yc_dim) of the packed slab
    out_ref,          # packed [ z_c | c | 0 ... ] slab, f32, lane-dense
    *, sub_rows, n_sub,
):
    # bf16 MXU operands, f32 accumulation everywhere; activations stay f32 between
    # matmuls (v5e VPU has no native bf16 elementwise).
    cdt = w1_ref.dtype

    def body(s, carry):
        r0 = pl.multiple_of(s * sub_rows, sub_rows)
        rows = pl.ds(r0, sub_rows)

        x = x_ref[rows, :]                                   # already bf16
        h = jnp.dot(x, w1_ref[...], preferred_element_type=jnp.float32) + b1_ref[...]
        h = jnp.maximum(h, 0.0)
        h = jnp.dot(h.astype(cdt), w2_ref[...], preferred_element_type=jnp.float32) + b2_ref[...]
        h = jnp.maximum(h, 0.0)
        z_c = jnp.dot(h.astype(cdt), w3_ref[...], preferred_element_type=jnp.float32) + b3_ref[...]
        g = jnp.dot(z_c.astype(cdt), w4_ref[...], preferred_element_type=jnp.float32) + b4_ref[...]
        g = jnp.maximum(g, 0.0)
        c = jnp.dot(g.astype(cdt), w5_ref[...], preferred_element_type=jnp.float32) + b5_ref[...]

        # z_c is nonzero only in columns [0, c_embed); c only in [c_embed, c_embed+yc_dim);
        # everything else is exactly zero, so a single add packs them losslessly.
        out_ref[rows, :] = (z_c + c).astype(out_ref.dtype)
        return carry

    lax.fori_loop(0, n_sub, body, None, unroll=True)


def _choose_batch_tile(batch, block_batch):
    tb_full = _round_up(batch, 16)
    if tb_full <= block_batch and batch < 1024:
        return tb_full                               # batch too small to split
    # Keep >= 2 grid steps whenever the batch allows it: v7x has 2 TensorCores and
    # the "parallel" batch axis is sharded across them (a length-1 grid idles one TC).
    tb = min(block_batch, _round_up((batch + 1) // 2, 16))
    if tb >= 512:
        tb = _round_up(tb, 256)                      # multiple of the in-kernel sub-chunk
    return max(tb, 16)


@functools.partial(jax.jit, static_argnames=("block_batch",))
def concept_encoder_forward(x, params, *, block_batch=1024):
    """x: [B, x_dim] float32. params: dict of [in,out] weights / [1,out] biases.

    Returns (c [B, yc_dim], z_c [B, c_embed_dim]) in float32.
    """
    B, x_dim = x.shape
    hidden = params["w1"].shape[1]
    c_embed = params["w3"].shape[1]
    yc_dim = params["w5"].shape[1]

    # Padding plan:
    #  * x feature dim only to a sublane multiple (full-extent last-dim block is legal;
    #    narrow lanes are cheap for input loads) -> no 4x DMA inflation on x.
    #  * hidden to 128 (internal matmul lane width).
    #  * concept head packed: z_c and c share one lane-dense slab of width P.
    xd = _round_up(x_dim, 8)
    hp = _round_up(hidden, 128)
    P = _round_up(c_embed + yc_dim, 128)

    TB = _choose_batch_tile(B, block_batch)
    Bp = _round_up(B, TB)
    SUB = 256 if (TB >= 512 and TB % 256 == 0) else TB
    n_sub = TB // SUB

    wdt = jnp.bfloat16
    # x fed as bf16 (it was cast to bf16 before the first dot anyway) -> halves its
    # HBM stream and the wrapper pad pass.
    x_pad = jnp.pad(x.astype(wdt), ((0, Bp - B), (0, xd - x_dim)))

    # Zero-padded, pre-transposed [in,out] weights (bf16) and [1,out] biases (f32).
    # Zeros propagate exactly through Linear+ReLU, so padded columns stay zero.
    # w5/b5 columns are shifted so c lands at columns [c_embed, c_embed+yc_dim).
    w1 = _pad2(params["w1"], xd, hp, wdt); b1 = _pad2(params["b1"], 1, hp, jnp.float32)
    w2 = _pad2(params["w2"], hp, hp, wdt); b2 = _pad2(params["b2"], 1, hp, jnp.float32)
    w3 = _pad2(params["w3"], hp, P, wdt);  b3 = _pad2(params["b3"], 1, P, jnp.float32)
    w4 = _pad2(params["w4"], P, P, wdt);   b4 = _pad2(params["b4"], 1, P, jnp.float32)
    w5 = _pad2(params["w5"], P, P, wdt, col_off=c_embed)
    b5 = _pad2(params["b5"], 1, P, jnp.float32, col_off=c_embed)

    def const_spec(shape):
        # Resident parameters: constant index_map -> DMA'd once, stay in VMEM.
        return pl.BlockSpec(shape, lambda i: (0, 0))

    in_specs = [
        pl.BlockSpec((TB, xd), lambda i: (i, 0)),      # x tile (auto double-buffered)
        const_spec((xd, hp)), const_spec((1, hp)),
        const_spec((hp, hp)), const_spec((1, hp)),
        const_spec((hp, P)), const_spec((1, P)),
        const_spec((P, P)), const_spec((1, P)),
        const_spec((P, P)), const_spec((1, P)),
    ]
    out_specs = pl.BlockSpec((TB, P), lambda i: (i, 0))   # packed lane-dense f32 slab

    # Cost estimate consistent with the optimized streams (bf16 weights & x, one f32 out).
    flops = 2 * Bp * (xd * hp + hp * hp + hp * P + 2 * P * P)
    bytes_accessed = (
        2 * (xd * hp + hp * hp + hp * P + 2 * P * P)   # bf16 weights (read once)
        + 4 * (2 * hp + 3 * P)                         # f32 biases
        + 2 * Bp * xd                                  # bf16 x in
        + 4 * Bp * P                                   # f32 packed out
    )
    cost = pl.CostEstimate(flops=flops, transcendentals=0, bytes_accessed=bytes_accessed)

    # VMEM budget: double-buffered params + pipelined x/out tiles + f32 intermediates
    # for one sub-chunk, 2x headroom, clamped to 48 MiB (safe for v7x's 64 MiB VMEM).
    param_bytes = 2 * (xd * hp + hp * hp + hp * P + 2 * P * P) + 4 * (2 * hp + 3 * P)
    tile_bytes = 2 * (TB * xd * 2 + TB * P * 4)
    interm_bytes = 4 * SUB * (2 * hp + 3 * P)
    vmem_limit = int(min(max(2 * (2 * param_bytes + tile_bytes + 2 * interm_bytes),
                             16 * 1024 * 1024), 48 * 1024 * 1024))

    kernel = functools.partial(concept_encoder_kernel, sub_rows=SUB, n_sub=n_sub)

    packed = pl.pallas_call(
        kernel,
        out_shape=jax.ShapeDtypeStruct((Bp, P), jnp.float32),
        grid=(Bp // TB,),
        in_specs=in_specs,
        out_specs=out_specs,
        compiler_params=pltpu.CompilerParams(
            dimension_semantics=("parallel",),
            vmem_limit_bytes=vmem_limit,
        ),
        cost_estimate=cost,
    )(x_pad, w1, b1, w2, b2, w3, b3, w4, b4, w5, b5)

    z_c = packed[:B, :c_embed]
    c = packed[:B, c_embed:c_embed + yc_dim]
    return c, z_c


def init_params(key, x_dim, c_embed_dim, yc_dim, hidden_dim):
    """Deterministic synthetic parameters; weights [in, out] in bf16, biases [1, out] f32.

    Note: storing weights in bf16 is an intentional (documented) precision choice vs
    the f32 PyTorch module; MXU accumulation remains f32.
    """
    ks = jax.random.split(key, 10)
    scale = 0.05

    def w(k, i, o):
        return (scale * jax.random.normal(k, (i, o))).astype(jnp.bfloat16)

    def b(k, o):
        return (scale * jax.random.normal(k, (1, o))).astype(jnp.float32)

    return {
        "w1": w(ks[0], x_dim, hidden_dim),        "b1": b(ks[1], hidden_dim),
        "w2": w(ks[2], hidden_dim, hidden_dim),   "b2": b(ks[3], hidden_dim),
        "w3": w(ks[4], hidden_dim, c_embed_dim),  "b3": b(ks[5], c_embed_dim),
        "w4": w(ks[6], c_embed_dim, c_embed_dim), "b4": b(ks[7], c_embed_dim),
        "w5": w(ks[8], c_embed_dim, yc_dim),      "b5": b(ks[9], yc_dim),
    }


def reference_forward(x, p):
    """Pure-JAX reference mirroring the kernel's bf16-operand / f32-accum math."""
    def lin(a, w, b):
        return jnp.dot(a.astype(jnp.bfloat16), w.astype(jnp.bfloat16),
                       preferred_element_type=jnp.float32) + b.astype(jnp.float32)

    h = jax.nn.relu(lin(x, p["w1"], p["b1"]))
    h = jax.nn.relu(lin(h, p["w2"], p["b2"]))
    z_c = lin(h, p["w3"], p["b3"])
    g = jax.nn.relu(lin(z_c, p["w4"], p["b4"]))
    c = lin(g, p["w5"], p["b5"])
    return c, z_c


if __name__ == "__main__":
    # Small shapes consistent with the module's MLP forward.
    B, x_dim, hidden_dim, c_embed_dim, yc_dim = 8, 32, 64, 32, 16

    key = jax.random.PRNGKey(0)
    k_x, k_p = jax.random.split(key)
    x = jax.random.normal(k_x, (B, x_dim), dtype=jnp.float32)
    params = init_params(k_p, x_dim, c_embed_dim, yc_dim, hidden_dim)

    c, z_c = concept_encoder_forward(x, params)
    jax.block_until_ready((c, z_c))

    c_ref, z_ref = reference_forward(x, params)
    assert c.shape == (B, yc_dim) and z_c.shape == (B, c_embed_dim)
    assert jnp.allclose(c, c_ref, atol=1e-3, rtol=1e-3)
    assert jnp.allclose(z_c, z_ref, atol=1e-3, rtol=1e-3)

    print("KERNEL_OK")
</pallas_src>

<mosaic_0001>
module attributes {stable_mosaic.version = 11 : i64} {
  func.func @concept_encoder_kernel(%arg0: i32, %arg1: memref<16x32xbf16, #tpu.memory_space<vmem>>, %arg2: memref<32x128xbf16, #tpu.memory_space<vmem>>, %arg3: memref<1x128xf32, #tpu.memory_space<vmem>>, %arg4: memref<128x128xbf16, #tpu.memory_space<vmem>>, %arg5: memref<1x128xf32, #tpu.memory_space<vmem>>, %arg6: memref<128x128xbf16, #tpu.memory_space<vmem>>, %arg7: memref<1x128xf32, #tpu.memory_space<vmem>>, %arg8: memref<128x128xbf16, #tpu.memory_space<vmem>>, %arg9: memref<1x128xf32, #tpu.memory_space<vmem>>, %arg10: memref<128x128xbf16, #tpu.memory_space<vmem>>, %arg11: memref<1x128xf32, #tpu.memory_space<vmem>>, %arg12: memref<16x128xf32, #tpu.memory_space<vmem>>) attributes {dimension_semantics = [#tpu.dimension_semantics<parallel>], iteration_bounds = array<i64: 1>, scalar_prefetch = 0 : i64, scratch_operands = 0 : i64, tpu.core_type = #tpu.core_type<tc>, window_params = [{transform_indices = @transform_0, window_bounds = array<i64: 16, 32>}, {pipeline_mode = #tpu.pipeline_mode<synchronous>, transform_indices = @transform_1, window_bounds = array<i64: 32, 128>}, {pipeline_mode = #tpu.pipeline_mode<synchronous>, transform_indices = @transform_2, window_bounds = array<i64: 1, 128>}, {pipeline_mode = #tpu.pipeline_mode<synchronous>, transform_indices = @transform_3, window_bounds = array<i64: 128, 128>}, {pipeline_mode = #tpu.pipeline_mode<synchronous>, transform_indices = @transform_4, window_bounds = array<i64: 1, 128>}, {pipeline_mode = #tpu.pipeline_mode<synchronous>, transform_indices = @transform_5, window_bounds = array<i64: 128, 128>}, {pipeline_mode = #tpu.pipeline_mode<synchronous>, transform_indices = @transform_6, window_bounds = array<i64: 1, 128>}, {pipeline_mode = #tpu.pipeline_mode<synchronous>, transform_indices = @transform_7, window_bounds = array<i64: 128, 128>}, {pipeline_mode = #tpu.pipeline_mode<synchronous>, transform_indices = @transform_8, window_bounds = array<i64: 1, 128>}, {pipeline_mode = #tpu.pipeline_mode<synchronous>, transform_indices = @transform_9, window_bounds = array<i64: 128, 128>}, {pipeline_mode = #tpu.pipeline_mode<synchronous>, transform_indices = @transform_10, window_bounds = array<i64: 1, 128>}, {transform_indices = @transform_11, window_bounds = array<i64: 16, 128>}]} {
    %c0_i32 = arith.constant 0 : i32
    %c16_i32 = arith.constant 16 : i32
    %0 = arith.muli %c0_i32, %c16_i32 : i32
    %1 = tpu.assume_multiple %0, 16 : i32
    %2 = arith.index_cast %1 : i32 to index
    %c0 = arith.constant 0 : index
    %3 = vector.load %arg1[%2, %c0] : memref<16x32xbf16, #tpu.memory_space<vmem>>, vector<16x32xbf16>
    %c0_0 = arith.constant 0 : index
    %c0_1 = arith.constant 0 : index
    %4 = vector.load %arg2[%c0_0, %c0_1] : memref<32x128xbf16, #tpu.memory_space<vmem>>, vector<32x128xbf16>
    %cst = arith.constant dense<0.000000e+00> : vector<16x128xf32>
    %5 = tpu.matmul %3, %4, %cst {dimension_numbers = #tpu.dot_dimension_numbers<[1], [0], [0], [1], [0, 0, 1, 1], [], []>} : vector<16x32xbf16>, vector<32x128xbf16>, vector<16x128xf32> -> vector<16x128xf32>
    %c0_2 = arith.constant 0 : index
    %c0_3 = arith.constant 0 : index
    %6 = vector.load %arg3[%c0_2, %c0_3] : memref<1x128xf32, #tpu.memory_space<vmem>>, vector<1x128xf32>
    %7 = vector.broadcast %6 : vector<1x128xf32> to vector<16x128xf32>
    %8 = arith.addf %5, %7 : vector<16x128xf32>
    %cst_4 = arith.constant 0.000000e+00 : f32
    %9 = vector.broadcast %cst_4 : f32 to vector<16x128xf32>
    %10 = arith.maximumf %8, %9 : vector<16x128xf32>
    %11 = arith.truncf %10 : vector<16x128xf32> to vector<16x128xbf16>
    %c0_5 = arith.constant 0 : index
    %c0_6 = arith.constant 0 : index
    %12 = vector.load %arg4[%c0_5, %c0_6] : memref<128x128xbf16, #tpu.memory_space<vmem>>, vector<128x128xbf16>
    %cst_7 = arith.constant dense<0.000000e+00> : vector<16x128xf32>
    %13 = tpu.matmul %11, %12, %cst_7 {dimension_numbers = #tpu.dot_dimension_numbers<[1], [0], [0], [1], [0, 0, 1, 1], [], []>} : vector<16x128xbf16>, vector<128x128xbf16>, vector<16x128xf32> -> vector<16x128xf32>
    %c0_8 = arith.constant 0 : index
    %c0_9 = arith.constant 0 : index
    %14 = vector.load %arg5[%c0_8, %c0_9] : memref<1x128xf32, #tpu.memory_space<vmem>>, vector<1x128xf32>
    %15 = vector.broadcast %14 : vector<1x128xf32> to vector<16x128xf32>
    %16 = arith.addf %13, %15 : vector<16x128xf32>
    %cst_10 = arith.constant 0.000000e+00 : f32
    %17 = vector.broadcast %cst_10 : f32 to vector<16x128xf32>
    %18 = arith.maximumf %16, %17 : vector<16x128xf32>
    %19 = arith.truncf %18 : vector<16x128xf32> to vector<16x128xbf16>
    %c0_11 = arith.constant 0 : index
    %c0_12 = arith.constant 0 : index
    %20 = vector.load %arg6[%c0_11, %c0_12] : memref<128x128xbf16, #tpu.memory_space<vmem>>, vector<128x128xbf16>
    %cst_13 = arith.constant dense<0.000000e+00> : vector<16x128xf32>
    %21 = tpu.matmul %19, %20, %cst_13 {dimension_numbers = #tpu.dot_dimension_numbers<[1], [0], [0], [1], [0, 0, 1, 1], [], []>} : vector<16x128xbf16>, vector<128x128xbf16>, vector<16x128xf32> -> vector<16x128xf32>
    %c0_14 = arith.constant 0 : index
    %c0_15 = arith.constant 0 : index
    %22 = vector.load %arg7[%c0_14, %c0_15] : memref<1x128xf32, #tpu.memory_space<vmem>>, vector<1x128xf32>
    %23 = vector.broadcast %22 : vector<1x128xf32> to vector<16x128xf32>
    %24 = arith.addf %21, %23 : vector<16x128xf32>
    %25 = arith.truncf %24 : vector<16x128xf32> to vector<16x128xbf16>
    %c0_16 = arith.constant 0 : index
    %c0_17 = arith.constant 0 : index
    %26 = vector.load %arg8[%c0_16, %c0_17] : memref<128x128xbf16, #tpu.memory_space<vmem>>, vector<128x128xbf16>
    %cst_18 = arith.constant dense<0.000000e+00> : vector<16x128xf32>
    %27 = tpu.matmul %25, %26, %cst_18 {dimension_numbers = #tpu.dot_dimension_numbers<[1], [0], [0], [1], [0, 0, 1, 1], [], []>} : vector<16x128xbf16>, vector<128x128xbf16>, vector<16x128xf32> -> vector<16x128xf32>
    %c0_19 = arith.constant 0 : index
    %c0_20 = arith.constant 0 : index
    %28 = vector.load %arg9[%c0_19, %c0_20] : memref<1x128xf32, #tpu.memory_space<vmem>>, vector<1x128xf32>
    %29 = vector.broadcast %28 : vector<1x128xf32> to vector<16x128xf32>
    %30 = arith.addf %27, %29 : vector<16x128xf32>
    %cst_21 = arith.constant 0.000000e+00 : f32
    %31 = vector.broadcast %cst_21 : f32 to vector<16x128xf32>
    %32 = arith.maximumf %30, %31 : vector<16x128xf32>
    %33 = arith.truncf %32 : vector<16x128xf32> to vector<16x128xbf16>
    %c0_22 = arith.constant 0 : index
    %c0_23 = arith.constant 0 : index
    %34 = vector.load %arg10[%c0_22, %c0_23] : memref<128x128xbf16, #tpu.memory_space<vmem>>, vector<128x128xbf16>
    %cst_24 = arith.constant dense<0.000000e+00> : vector<16x128xf32>
    %35 = tpu.matmul %33, %34, %cst_24 {dimension_numbers = #tpu.dot_dimension_numbers<[1], [0], [0], [1], [0, 0, 1, 1], [], []>} : vector<16x128xbf16>, vector<128x128xbf16>, vector<16x128xf32> -> vector<16x128xf32>
    %c0_25 = arith.constant 0 : index
    %c0_26 = arith.constant 0 : index
    %36 = vector.load %arg11[%c0_25, %c0_26] : memref<1x128xf32, #tpu.memory_space<vmem>>, vector<1x128xf32>
    %37 = vector.broadcast %36 : vector<1x128xf32> to vector<16x128xf32>
    %38 = arith.addf %35, %37 : vector<16x128xf32>
    %39 = arith.addf %24, %38 : vector<16x128xf32>
    %40 = arith.index_cast %1 : i32 to index
    %c0_27 = arith.constant 0 : index
    %41 = vector.load %arg12[%40, %c0_27] : memref<16x128xf32, #tpu.memory_space<vmem>>, vector<16x128xf32>
    tpu.vector_store %arg12[%40, %c0_27], %39 {strides = array<i32>} : memref<16x128xf32, #tpu.memory_space<vmem>>, vector<16x128xf32>,
    %c1_i32 = arith.constant 1 : i32
    return
  }
  func.func @transform_0(%arg0: i32) -> (i32, i32) {
    %c0_i32 = arith.constant 0 : i32
    %c0_i32_0 = arith.constant 0 : i32
    return %arg0, %c0_i32 : i32, i32
  }
  func.func @transform_1(%arg0: i32) -> (i32, i32) {
    %c0_i32 = arith.constant 0 : i32
    %c0_i32_0 = arith.constant 0 : i32
    %c0_i32_1 = arith.constant 0 : i32
    return %c0_i32, %c0_i32_0 : i32, i32
  }
  func.func @transform_2(%arg0: i32) -> (i32, i32) {
    %c0_i32 = arith.constant 0 : i32
    %c0_i32_0 = arith.constant 0 : i32
    %c0_i32_1 = arith.constant 0 : i32
    return %c0_i32, %c0_i32_0 : i32, i32
  }
  func.func @transform_3(%arg0: i32) -> (i32, i32) {
    %c0_i32 = arith.constant 0 : i32
    %c0_i32_0 = arith.constant 0 : i32
    %c0_i32_1 = arith.constant 0 : i32
    return %c0_i32, %c0_i32_0 : i32, i32
  }
  func.func @transform_4(%arg0: i32) -> (i32, i32) {
    %c0_i32 = arith.constant 0 : i32
    %c0_i32_0 = arith.constant 0 : i32
    %c0_i32_1 = arith.constant 0 : i32
    return %c0_i32, %c0_i32_0 : i32, i32
  }
  func.func @transform_5(%arg0: i32) -> (i32, i32) {
    %c0_i32 = arith.constant 0 : i32
    %c0_i32_0 = arith.constant 0 : i32
    %c0_i32_1 = arith.constant 0 : i32
    return %c0_i32, %c0_i32_0 : i32, i32
  }
  func.func @transform_6(%arg0: i32) -> (i32, i32) {
    %c0_i32 = arith.constant 0 : i32
    %c0_i32_0 = arith.constant 0 : i32
    %c0_i32_1 = arith.constant 0 : i32
    return %c0_i32, %c0_i32_0 : i32, i32
  }
  func.func @transform_7(%arg0: i32) -> (i32, i32) {
    %c0_i32 = arith.constant 0 : i32
    %c0_i32_0 = arith.constant 0 : i32
    %c0_i32_1 = arith.constant 0 : i32
    return %c0_i32, %c0_i32_0 : i32, i32
  }
  func.func @transform_8(%arg0: i32) -> (i32, i32) {
    %c0_i32 = arith.constant 0 : i32
    %c0_i32_0 = arith.constant 0 : i32
    %c0_i32_1 = arith.constant 0 : i32
    return %c0_i32, %c0_i32_0 : i32, i32
  }
  func.func @transform_9(%arg0: i32) -> (i32, i32) {
    %c0_i32 = arith.constant 0 : i32
    %c0_i32_0 = arith.constant 0 : i32
    %c0_i32_1 = arith.constant 0 : i32
    return %c0_i32, %c0_i32_0 : i32, i32
  }
  func.func @transform_10(%arg0: i32) -> (i32, i32) {
    %c0_i32 = arith.constant 0 : i32
    %c0_i32_0 = arith.constant 0 : i32
    %c0_i32_1 = arith.constant 0 : i32
    return %c0_i32, %c0_i32_0 : i32, i32
  }
  func.func @transform_11(%arg0: i32) -> (i32, i32) {
    %c0_i32 = arith.constant 0 : i32
    %c0_i32_0 = arith.constant 0 : i32
    return %arg0, %c0_i32 : i32, i32
  }
}

</mosaic_0001>

<llo_original>
// kernel: concept_encoder_forward.1
$region0: #{concept_encoder_forward.1}
  #allocation0 [shape = 'u32[]', space=smem, size = 0x4, offset = 0x4, fixed_abs, tag = 'smem constant byte address 0x4 - core index']
  #allocation1 [shape = 'u32[144,128]{1,0:T(1,128)}', space=vmem, size = 0x12000, scoped, tag = 'internal scratch']
  %s0 = inlined_call_operand.vmem [shape: bf16[16,32], index: 0, kind: input, shape index: {}]
  %s1 = inlined_call_operand.vmem [shape: bf16[32,128], index: 1, kind: input, shape index: {}]
  %s2 = inlined_call_operand.vmem [shape: f32[1,128], index: 2, kind: input, shape index: {}]
  %s3 = inlined_call_operand.vmem [shape: bf16[128,128], index: 3, kind: input, shape index: {}]
  %s4 = inlined_call_operand.vmem [shape: f32[1,128], index: 4, kind: input, shape index: {}]
  %s5 = inlined_call_operand.vmem [shape: bf16[128,128], index: 5, kind: input, shape index: {}]
  %s6 = inlined_call_operand.vmem [shape: f32[1,128], index: 6, kind: input, shape index: {}]
  %s7 = inlined_call_operand.vmem [shape: bf16[128,128], index: 7, kind: input, shape index: {}]
  %s8 = inlined_call_operand.vmem [shape: f32[1,128], index: 8, kind: input, shape index: {}]
  %s9 = inlined_call_operand.vmem [shape: bf16[128,128], index: 9, kind: input, shape index: {}]
  %s10 = inlined_call_operand.vmem [shape: f32[1,128], index: 10, kind: input, shape index: {}]
  %s11 = inlined_call_operand.vmem [shape: f32[16,128], index: 11, kind: output, shape index: {}]
  %s12 = sld [smem:[#allocation0]]
  $region54: #{concept_encoder_forward.1} parent=0
    _
  %s14 = ssub.s32 1, %s12
  %s15 = scalar_select 0, %s14, %s12
  // Predicated region
  $region2: #{concept_encoder_forward.1} parent=0 // pred_check
    _
  $region3: #{concept_encoder_forward.1} parent=0 // pred_check_branch
    %17 = sbr.rel (0) target = $region5
  $region4: #{concept_encoder_forward.1} parent=0 // pred_region
    _
  $region5: #{concept_encoder_forward.1} parent=0 // pred_fallthru
    _
  // Predicated region
  $region6: #{concept_encoder_forward.1} parent=0 // pred_check
    _
  $region7: #{concept_encoder_forward.1} parent=0 // pred_check_branch
    %19 = sbr.rel (0) target = $region9
  $region8: #{concept_encoder_forward.1} parent=0 // pred_region
    _
  $region9: #{concept_encoder_forward.1} parent=0 // pred_fallthru
    _
  // Predicated region
  $region10: #{concept_encoder_forward.1} parent=0 // pred_check
    _
  $region11: #{concept_encoder_forward.1} parent=0 // pred_check_branch
    %21 = sbr.rel (0) target = $region13
  $region12: #{concept_encoder_forward.1} parent=0 // pred_region
    _
  $region13: #{concept_encoder_forward.1} parent=0 // pred_fallthru
    _
  // Predicated region
  $region14: #{concept_encoder_forward.1} parent=0 // pred_check
    _
  $region15: #{concept_encoder_forward.1} parent=0 // pred_check_branch
    %23 = sbr.rel (0) target = $region17
  $region16: #{concept_encoder_forward.1} parent=0 // pred_region
    _
  $region17: #{concept_encoder_forward.1} parent=0 // pred_fallthru
    _
  // Predicated region
  $region18: #{concept_encoder_forward.1} parent=0 // pred_check
    _
  $region19: #{concept_encoder_forward.1} parent=0 // pred_check_branch
    %25 = sbr.rel (0) target = $region21
  $region20: #{concept_encoder_forward.1} parent=0 // pred_region
    _
  $region21: #{concept_encoder_forward.1} parent=0 // pred_fallthru
    _
  // Predicated region
  $region22: #{concept_encoder_forward.1} parent=0 // pred_check
    _
  $region23: #{concept_encoder_forward.1} parent=0 // pred_check_branch
    %27 = sbr.rel (0) target = $region25
  $region24: #{concept_encoder_forward.1} parent=0 // pred_region
    _
  $region25: #{concept_encoder_forward.1} parent=0 // pred_fallthru
    _
  // Predicated region
  $region26: #{concept_encoder_forward.1} parent=0 // pred_check
    _
  $region27: #{concept_encoder_forward.1} parent=0 // pred_check_branch
    %29 = sbr.rel (0) target = $region29
  $region28: #{concept_encoder_forward.1} parent=0 // pred_region
    _
  $region29: #{concept_encoder_forward.1} parent=0 // pred_fallthru
    _
  // Predicated region
  $region30: #{concept_encoder_forward.1} parent=0 // pred_check
    _
  $region31: #{concept_encoder_forward.1} parent=0 // pred_check_branch
    %31 = sbr.rel (0) target = $region33
  $region32: #{concept_encoder_forward.1} parent=0 // pred_region
    _
  $region33: #{concept_encoder_forward.1} parent=0 // pred_fallthru
    _
  // Predicated region
  $region34: #{concept_encoder_forward.1} parent=0 // pred_check
    _
  $region35: #{concept_encoder_forward.1} parent=0 // pred_check_branch
    %33 = sbr.rel (0) target = $region37
  $region36: #{concept_encoder_forward.1} parent=0 // pred_region
    _
  $region37: #{concept_encoder_forward.1} parent=0 // pred_fallthru
    _
  // Predicated region
  $region38: #{concept_encoder_forward.1} parent=0 // pred_check
    _
  $region39: #{concept_encoder_forward.1} parent=0 // pred_check_branch
    %35 = sbr.rel (0) target = $region41
  $region40: #{concept_encoder_forward.1} parent=0 // pred_region
    _
  $region41: #{concept_encoder_forward.1} parent=0 // pred_fallthru
    _
  // Predicated region
  $region42: #{concept_encoder_forward.1} parent=0 // pred_check
    _
  $region43: #{concept_encoder_forward.1} parent=0 // pred_check_branch
    %37 = sbr.rel (0) target = $region45
  $region44: #{concept_encoder_forward.1} parent=0 // pred_region
    _
  $region45: #{concept_encoder_forward.1} parent=0 // pred_fallthru
    _
  %v39 = vld [vmem:[%s0] sm:$0xf]
  %v40 = vld [vmem:[%s0 + $0x4] sm:$0xf]
  %v41 = vld [vmem:[%s1] sm:$0xf]
  %v42 = vld [vmem:[%s1 + $0x4] sm:$0xf]
  %v43 = vld [vmem:[%s1 + $0x8] sm:$0xf]
  %v44 = vld [vmem:[%s1 + $0xc] sm:$0xf]
  %v45 = vld [vmem:[%s2] sm:$0x1]
  %v47 = vlaneseq
  %v48 = vshrl.u32 %v47, 7
  %v49 = vsub.s32 0, %v48
  %v50 = vrot.slane %v45, %v49
  %v54 = vunpack.c.l.b16 %v39
  %v55 = vunpack.c.l.b16 %v40
  %v56 = vpack.c.b16 %v55, %v54
  %v61 = vunpack.c.l.b16 %v41
  %v62 = vunpack.c.l.b16 %v42
  %v63 = vunpack.c.l.b16 %v43
  %v64 = vunpack.c.l.b16 %v44
  %v65 = vpack.c.b16 %v62, %v61
  %v66 = vpack.c.b16 %v64, %v63
  %vm69 = vcmask 261120
  %v71 = vsel %vm69, %v56, 0
  %73 = vmatprep.subr.bf16.mxu0 0
  %74 = vmatpush1.bf16.msra.mxu0 %v65
  %75 = vmatprep.subr.bf16.mxu0 0
  %76 = vmatpush1.bf16.msra.mxu0 %v66
  %77 = vmatprep.subr.bf16.mxu0 0
  %78 = vmatpush1.bf16.msra.mxu0 0
  %79 = vmatprep.subr.bf16.mxu0 0
  %80 = vmatpush1.bf16.msra.mxu0 0
  %81 = vmatprep.subr.bf16.mxu0 0
  %82 = vmatpush1.bf16.msra.mxu0 0
  %83 = vmatprep.subr.bf16.mxu0 0
  %84 = vmatpush1.bf16.msra.mxu0 0
  %85 = vmatprep.subr.bf16.mxu0 0
  %86 = vmatpush1.bf16.msra.mxu0 0
  %87 = vmatprep.subr.bf16.mxu0 0
  %88 = vmatpush1.bf16.msra.mxu0 0
  %89 = vmatprep.subr.bf16.mxu0 0
  %90 = vmatpush1.bf16.msra.mxu0 0
  %91 = vmatprep.subr.bf16.mxu0 0
  %92 = vmatpush1.bf16.msra.mxu0 0
  %93 = vmatprep.subr.bf16.mxu0 0
  %94 = vmatpush1.bf16.msra.mxu0 0
  %95 = vmatprep.subr.bf16.mxu0 0
  %96 = vmatpush1.bf16.msra.mxu0 0
  %97 = vmatprep.subr.bf16.mxu0 0
  %98 = vmatpush1.bf16.msra.mxu0 0
  %99 = vmatprep.subr.bf16.mxu0 0
  %100 = vmatpush1.bf16.msra.mxu0 0
  %101 = vmatprep.subr.bf16.mxu0 0
  %102 = vmatpush1.bf16.msra.mxu0 0
  %103 = vmatprep.subr.bf16.mxu0 0
  %104 = vmatpush1.bf16.msra.mxu0 0
  %105 = vmatprep.mubr.bf16.mxu0 0
  %106 = vmatmul.mubr.bf16.gmra.mrb[0].mxu0 %v71
  %v107 = vpop.f32.mrb[0].mxu0
  %v108 = vadd.f32 %v50, %v107
  %v109 = vpop.f32.mrb[0].mxu0
  %v110 = vpop.f32.mrb[0].mxu0
  %v111 = vadd.f32 %v50, %v110
  %v112 = vpop.f32.mrb[0].mxu0
  %113 = vdwg.mxu0
  %v114 = vmax.f32 %v108, 0.0
  %v115 = vmax.f32 %v111, 0.0
  %v116 = vpack.c.bf16 %v115, %v114
  %v117 = vld [vmem:[%s3] sm:$0xf]
  %v118 = vld [vmem:[%s3 + $0x4] sm:$0xf]
  %v119 = vld [vmem:[%s3 + $0x8] sm:$0xf]
  %v120 = vld [vmem:[%s3 + $0xc] sm:$0xf]
  %v121 = vld [vmem:[%s3 + $0x10] sm:$0xf]
  %v122 = vld [vmem:[%s3 + $0x14] sm:$0xf]
  %v123 = vld [vmem:[%s3 + $0x18] sm:$0xf]
  %v124 = vld [vmem:[%s3 + $0x1c] sm:$0xf]
  %v125 = vld [vmem:[%s3 + $0x20] sm:$0xf]
  %v126 = vld [vmem:[%s3 + $0x24] sm:$0xf]
  %v127 = vld [vmem:[%s3 + $0x28] sm:$0xf]
  %v128 = vld [vmem:[%s3 + $0x2c] sm:$0xf]
  %v129 = vld [vmem:[%s3 + $0x30] sm:$0xf]
  %v130 = vld [vmem:[%s3 + $0x34] sm:$0xf]
  %v131 = vld [vmem:[%s3 + $0x38] sm:$0xf]
  %v132 = vld [vmem:[%s3 + $0x3c] sm:$0xf]
  %v133 = vld [vmem:[%s4] sm:$0x1]
  %v135 = vlaneseq
  %v136 = vshrl.u32 %v135, 7
  %v137 = vsub.s32 0, %v136
  %v138 = vrot.slane %v133, %v137
  %v156 = vunpack.c.l.b16 %v117
  %v157 = vunpack.c.l.b16 %v118
  %v158 = vunpack.c.l.b16 %v119
  %v159 = vunpack.c.l.b16 %v120
  %v160 = vunpack.c.l.b16 %v121
  %v161 = vunpack.c.l.b16 %v122
  %v162 = vunpack.c.l.b16 %v123
  %v163 = vunpack.c.l.b16 %v124
  %v164 = vunpack.c.l.b16 %v125
  %v165 = vunpack.c.l.b16 %v126
  %v166 = vunpack.c.l.b16 %v127
  %v167 = vunpack.c.l.b16 %v128
  %v168 = vunpack.c.l.b16 %v129
  %v169 = vunpack.c.l.b16 %v130
  %v170 = vunpack.c.l.b16 %v131
  %v171 = vunpack.c.l.b16 %v132
  %v172 = vpack.c.b16 %v157, %v156
  %v173 = vpack.c.b16 %v159, %v158
  %v174 = vpack.c.b16 %v161, %v160
  %v175 = vpack.c.b16 %v163, %v162
  %v176 = vpack.c.b16 %v165, %v164
  %v177 = vpack.c.b16 %v167, %v166
  %v178 = vpack.c.b16 %v169, %v168
  %v179 = vpack.c.b16 %v171, %v170
  %188 = vmatprep.subr.bf16.mxu0 0
  %189 = vmatpush1.bf16.msra.mxu0 %v172
  %190 = vmatprep.subr.bf16.mxu0 0
  %191 = vmatpush1.bf16.msra.mxu0 %v173
  %192 = vmatprep.subr.bf16.mxu0 0
  %193 = vmatpush1.bf16.msra.mxu0 %v174
  %194 = vmatprep.subr.bf16.mxu0 0
  %195 = vmatpush1.bf16.msra.mxu0 %v175
  %196 = vmatprep.subr.bf16.mxu0 0
  %197 = vmatpush1.bf16.msra.mxu0 %v176
  %198 = vmatprep.subr.bf16.mxu0 0
  %199 = vmatpush1.bf16.msra.mxu0 %v177
  %200 = vmatprep.subr.bf16.mxu0 0
  %201 = vmatpush1.bf16.msra.mxu0 %v178
  %202 = vmatprep.subr.bf16.mxu0 0
  %203 = vmatpush1.bf16.msra.mxu0 %v179
  %204 = vmatprep.subr.bf16.mxu0 0
  %205 = vmatpush1.bf16.msra.mxu0 0
  %206 = vmatprep.subr.bf16.mxu0 0
  %207 = vmatpush1.bf16.msra.mxu0 0
  %208 = vmatprep.subr.bf16.mxu0 0
  %209 = vmatpush1.bf16.msra.mxu0 0
  %210 = vmatprep.subr.bf16.mxu0 0
  %211 = vmatpush1.bf16.msra.mxu0 0
  %212 = vmatprep.subr.bf16.mxu0 0
  %213 = vmatpush1.bf16.msra.mxu0 0
  %214 = vmatprep.subr.bf16.mxu0 0
  %215 = vmatpush1.bf16.msra.mxu0 0
  %216 = vmatprep.subr.bf16.mxu0 0
  %217 = vmatpush1.bf16.msra.mxu0 0
  %218 = vmatprep.subr.bf16.mxu0 0
  %219 = vmatpush1.bf16.msra.mxu0 0
  %220 = vmatprep.mubr.bf16.mxu0 0
  %221 = vmatmul.mubr.bf16.gmra.mrb[0].mxu0 %v116
  %v222 = vpop.f32.mrb[0].mxu0
  %v223 = vadd.f32 %v138, %v222
  %v224 = vpop.f32.mrb[0].mxu0
  %v225 = vpop.f32.mrb[0].mxu0
  %v226 = vadd.f32 %v138, %v225
  %v227 = vpop.f32.mrb[0].mxu0
  %228 = vdwg.mxu0
  %v229 = vmax.f32 %v223, 0.0
  %v230 = vmax.f32 %v226, 0.0
  %v231 = vpack.c.bf16 %v230, %v229
  %v232 = vld [vmem:[%s5] sm:$0xf]
  %v233 = vld [vmem:[%s5 + $0x4] sm:$0xf]
  %v234 = vld [vmem:[%s5 + $0x8] sm:$0xf]
  %v235 = vld [vmem:[%s5 + $0xc] sm:$0xf]
  %v236 = vld [vmem:[%s5 + $0x10] sm:$0xf]
  %v237 = vld [vmem:[%s5 + $0x14] sm:$0xf]
  %v238 = vld [vmem:[%s5 + $0x18] sm:$0xf]
  %v239 = vld [vmem:[%s5 + $0x1c] sm:$0xf]
  %v240 = vld [vmem:[%s5 + $0x20] sm:$0xf]
  %v241 = vld [vmem:[%s5 + $0x24] sm:$0xf]
  %v242 = vld [vmem:[%s5 + $0x28] sm:$0xf]
  %v243 = vld [vmem:[%s5 + $0x2c] sm:$0xf]
  %v244 = vld [vmem:[%s5 + $0x30] sm:$0xf]
  %v245 = vld [vmem:[%s5 + $0x34] sm:$0xf]
  %v246 = vld [vmem:[%s5 + $0x38] sm:$0xf]
  %v247 = vld [vmem:[%s5 + $0x3c] sm:$0xf]
  %v248 = vld [vmem:[%s6] sm:$0x1]
  %v250 = vlaneseq
  %v251 = vshrl.u32 %v250, 7
  %v252 = vsub.s32 0, %v251
  %v253 = vrot.slane %v248, %v252
  %v271 = vunpack.c.l.b16 %v232
  %v272 = vunpack.c.l.b16 %v233
  %v273 = vunpack.c.l.b16 %v234
  %v274 = vunpack.c.l.b16 %v235
  %v275 = vunpack.c.l.b16 %v236
  %v276 = vunpack.c.l.b16 %v237
  %v277 = vunpack.c.l.b16 %v238
  %v278 = vunpack.c.l.b16 %v239
  %v279 = vunpack.c.l.b16 %v240
  %v280 = vunpack.c.l.b16 %v241
  %v281 = vunpack.c.l.b16 %v242
  %v282 = vunpack.c.l.b16 %v243
  %v283 = vunpack.c.l.b16 %v244
  %v284 = vunpack.c.l.b16 %v245
  %v285 = vunpack.c.l.b16 %v246
  %v286 = vunpack.c.l.b16 %v247
  %v287 = vpack.c.b16 %v272, %v271
  %v288 = vpack.c.b16 %v274, %v273
  %v289 = vpack.c.b16 %v276, %v275
  %v290 = vpack.c.b16 %v278, %v277
  %v291 = vpack.c.b16 %v280, %v279
  %v292 = vpack.c.b16 %v282, %v281
  %v293 = vpack.c.b16 %v284, %v283
  %v294 = vpack.c.b16 %v286, %v285
  %303 = vmatprep.subr.bf16.mxu0 0
  %304 = vmatpush1.bf16.msra.mxu0 %v287
  %305 = vmatprep.subr.bf16.mxu0 0
  %306 = vmatpush1.bf16.msra.mxu0 %v288
  %307 = vmatprep.subr.bf16.mxu0 0
  %308 = vmatpush1.bf16.msra.mxu0 %v289
  %309 = vmatprep.subr.bf16.mxu0 0
  %310 = vmatpush1.bf16.msra.mxu0 %v290
  %311 = vmatprep.subr.bf16.mxu0 0
  %312 = vmatpush1.bf16.msra.mxu0 %v291
  %313 = vmatprep.subr.bf16.mxu0 0
  %314 = vmatpush1.bf16.msra.mxu0 %v292
  %315 = vmatprep.subr.bf16.mxu0 0
  %316 = vmatpush1.bf16.msra.mxu0 %v293
  %317 = vmatprep.subr.bf16.mxu0 0
  %318 = vmatpush1.bf16.msra.mxu0 %v294
  %319 = vmatprep.subr.bf16.mxu0 0
  %320 = vmatpush1.bf16.msra.mxu0 0
  %321 = vmatprep.subr.bf16.mxu0 0
  %322 = vmatpush1.bf16.msra.mxu0 0
  %323 = vmatprep.subr.bf16.mxu0 0
  %324 = vmatpush1.bf16.msra.mxu0 0
  %325 = vmatprep.subr.bf16.mxu0 0
  %326 = vmatpush1.bf16.msra.mxu0 0
  %327 = vmatprep.subr.bf16.mxu0 0
  %328 = vmatpush1.bf16.msra.mxu0 0
  %329 = vmatprep.subr.bf16.mxu0 0
  %330 = vmatpush1.bf16.msra.mxu0 0
  %331 = vmatprep.subr.bf16.mxu0 0
  %332 = vmatpush1.bf16.msra.mxu0 0
  %333 = vmatprep.subr.bf16.mxu0 0
  %334 = vmatpush1.bf16.msra.mxu0 0
  %335 = vmatprep.mubr.bf16.mxu0 0
  %336 = vmatmul.mubr.bf16.gmra.mrb[0].mxu0 %v231
  %v337 = vpop.f32.mrb[0].mxu0
  %v338 = vadd.f32 %v253, %v337
  %v339 = vpop.f32.mrb[0].mxu0
  %v340 = vpop.f32.mrb[0].mxu0
  %v341 = vadd.f32 %v253, %v340
  %v342 = vpop.f32.mrb[0].mxu0
  %343 = vdwg.mxu0
  %v344 = vpack.c.bf16 %v341, %v338
  %v345 = vld [vmem:[%s7] sm:$0xf]
  %v346 = vld [vmem:[%s7 + $0x4] sm:$0xf]
  %v347 = vld [vmem:[%s7 + $0x8] sm:$0xf]
  %v348 = vld [vmem:[%s7 + $0xc] sm:$0xf]
  %v349 = vld [vmem:[%s7 + $0x10] sm:$0xf]
  %v350 = vld [vmem:[%s7 + $0x14] sm:$0xf]
  %v351 = vld [vmem:[%s7 + $0x18] sm:$0xf]
  %v352 = vld [vmem:[%s7 + $0x1c] sm:$0xf]
  %v353 = vld [vmem:[%s7 + $0x20] sm:$0xf]
  %v354 = vld [vmem:[%s7 + $0x24] sm:$0xf]
  %v355 = vld [vmem:[%s7 + $0x28] sm:$0xf]
  %v356 = vld [vmem:[%s7 + $0x2c] sm:$0xf]
  %v357 = vld [vmem:[%s7 + $0x30] sm:$0xf]
  %v358 = vld [vmem:[%s7 + $0x34] sm:$0xf]
  %v359 = vld [vmem:[%s7 + $0x38] sm:$0xf]
  %v360 = vld [vmem:[%s7 + $0x3c] sm:$0xf]
  %v361 = vld [vmem:[%s8] sm:$0x1]
  %v363 = vlaneseq
  %v364 = vshrl.u32 %v363, 7
  %v365 = vsub.s32 0, %v364
  %v366 = vrot.slane %v361, %v365
  %v384 = vunpack.c.l.b16 %v345
  %v385 = vunpack.c.l.b16 %v346
  %v386 = vunpack.c.l.b16 %v347
  %v387 = vunpack.c.l.b16 %v348
  %v388 = vunpack.c.l.b16 %v349
  %v389 = vunpack.c.l.b16 %v350
  %v390 = vunpack.c.l.b16 %v351
  %v391 = vunpack.c.l.b16 %v352
  %v392 = vunpack.c.l.b16 %v353
  %v393 = vunpack.c.l.b16 %v354
  %v394 = vunpack.c.l.b16 %v355
  %v395 = vunpack.c.l.b16 %v356
  %v396 = vunpack.c.l.b16 %v357
  %v397 = vunpack.c.l.b16 %v358
  %v398 = vunpack.c.l.b16 %v359
  %v399 = vunpack.c.l.b16 %v360
  %v400 = vpack.c.b16 %v385, %v384
  %v401 = vpack.c.b16 %v387, %v386
  %v402 = vpack.c.b16 %v389, %v388
  %v403 = vpack.c.b16 %v391, %v390
  %v404 = vpack.c.b16 %v393, %v392
  %v405 = vpack.c.b16 %v395, %v394
  %v406 = vpack.c.b16 %v397, %v396
  %v407 = vpack.c.b16 %v399, %v398
  %416 = vmatprep.subr.bf16.mxu0 0
  %417 = vmatpush1.bf16.msra.mxu0 %v400
  %418 = vmatprep.subr.bf16.mxu0 0
  %419 = vmatpush1.bf16.msra.mxu0 %v401
  %420 = vmatprep.subr.bf16.mxu0 0
  %421 = vmatpush1.bf16.msra.mxu0 %v402
  %422 = vmatprep.subr.bf16.mxu0 0
  %423 = vmatpush1.bf16.msra.mxu0 %v403
  %424 = vmatprep.subr.bf16.mxu0 0
  %425 = vmatpush1.bf16.msra.mxu0 %v404
  %426 = vmatprep.subr.bf16.mxu0 0
  %427 = vmatpush1.bf16.msra.mxu0 %v405
  %428 = vmatprep.subr.bf16.mxu0 0
  %429 = vmatpush1.bf16.msra.mxu0 %v406
  %430 = vmatprep.subr.bf16.mxu0 0
  %431 = vmatpush1.bf16.msra.mxu0 %v407
  %432 = vmatprep.subr.bf16.mxu0 0
  %433 = vmatpush1.bf16.msra.mxu0 0
  %434 = vmatprep.subr.bf16.mxu0 0
  %435 = vmatpush1.bf16.msra.mxu0 0
  %436 = vmatprep.subr.bf16.mxu0 0
  %437 = vmatpush1.bf16.msra.mxu0 0
  %438 = vmatprep.subr.bf16.mxu0 0
  %439 = vmatpush1.bf16.msra.mxu0 0
  %440 = vmatprep.subr.bf16.mxu0 0
  %441 = vmatpush1.bf16.msra.mxu0 0
  %442 = vmatprep.subr.bf16.mxu0 0
  %443 = vmatpush1.bf16.msra.mxu0 0
  %444 = vmatprep.subr.bf16.mxu0 0
  %445 = vmatpush1.bf16.msra.mxu0 0
  %446 = vmatprep.subr.bf16.mxu0 0
  %447 = vmatpush1.bf16.msra.mxu0 0
  %448 = vmatprep.mubr.bf16.mxu0 0
  %449 = vmatmul.mubr.bf16.gmra.mrb[0].mxu0 %v344
  %v450 = vpop.f32.mrb[0].mxu0
  %v451 = vadd.f32 %v366, %v450
  %v452 = vpop.f32.mrb[0].mxu0
  %v453 = vpop.f32.mrb[0].mxu0
  %v454 = vadd.f32 %v366, %v453
  %v455 = vpop.f32.mrb[0].mxu0
  %456 = vdwg.mxu0
  %v457 = vmax.f32 %v451, 0.0
  %v458 = vmax.f32 %v454, 0.0
  %v459 = vpack.c.bf16 %v458, %v457
  %v460 = vld [vmem:[%s9] sm:$0xf]
  %v461 = vld [vmem:[%s9 + $0x4] sm:$0xf]
  %v462 = vld [vmem:[%s9 + $0x8] sm:$0xf]
  %v463 = vld [vmem:[%s9 + $0xc] sm:$0xf]
  %v464 = vld [vmem:[%s9 + $0x10] sm:$0xf]
  %v465 = vld [vmem:[%s9 + $0x14] sm:$0xf]
  %v466 = vld [vmem:[%s9 + $0x18] sm:$0xf]
  %v467 = vld [vmem:[%s9 + $0x1c] sm:$0xf]
  %v468 = vld [vmem:[%s9 + $0x20] sm:$0xf]
  %v469 = vld [vmem:[%s9 + $0x24] sm:$0xf]
  %v470 = vld [vmem:[%s9 + $0x28] sm:$0xf]
  %v471 = vld [vmem:[%s9 + $0x2c] sm:$0xf]
  %v472 = vld [vmem:[%s9 + $0x30] sm:$0xf]
  %v473 = vld [vmem:[%s9 + $0x34] sm:$0xf]
  %v474 = vld [vmem:[%s9 + $0x38] sm:$0xf]
  %v475 = vld [vmem:[%s9 + $0x3c] sm:$0xf]
  %v476 = vld [vmem:[%s10] sm:$0x1]
  %v478 = vlaneseq
  %v479 = vshrl.u32 %v478, 7
  %v480 = vsub.s32 0, %v479
  %v481 = vrot.slane %v476, %v480
  %v499 = vunpack.c.l.b16 %v460
  %v500 = vunpack.c.l.b16 %v461
  %v501 = vunpack.c.l.b16 %v462
  %v502 = vunpack.c.l.b16 %v463
  %v503 = vunpack.c.l.b16 %v464
  %v504 = vunpack.c.l.b16 %v465
  %v505 = vunpack.c.l.b16 %v466
  %v506 = vunpack.c.l.b16 %v467
  %v507 = vunpack.c.l.b16 %v468
  %v508 = vunpack.c.l.b16 %v469
  %v509 = vunpack.c.l.b16 %v470
  %v510 = vunpack.c.l.b16 %v471
  %v511 = vunpack.c.l.b16 %v472
  %v512 = vunpack.c.l.b16 %v473
  %v513 = vunpack.c.l.b16 %v474
  %v514 = vunpack.c.l.b16 %v475
  %v515 = vpack.c.b16 %v500, %v499
  %v516 = vpack.c.b16 %v502, %v501
  %v517 = vpack.c.b16 %v504, %v503
  %v518 = vpack.c.b16 %v506, %v505
  %v519 = vpack.c.b16 %v508, %v507
  %v520 = vpack.c.b16 %v510, %v509
  %v521 = vpack.c.b16 %v512, %v511
  %v522 = vpack.c.b16 %v514, %v513
  %531 = vmatprep.subr.bf16.mxu0 0
  %532 = vmatpush1.bf16.msra.mxu0 %v515
  %533 = vmatprep.subr.bf16.mxu0 0
  %534 = vmatpush1.bf16.msra.mxu0 %v516
  %535 = vmatprep.subr.bf16.mxu0 0
  %536 = vmatpush1.bf16.msra.mxu0 %v517
  %537 = vmatprep.subr.bf16.mxu0 0
  %538 = vmatpush1.bf16.msra.mxu0 %v518
  %539 = vmatprep.subr.bf16.mxu0 0
  %540 = vmatpush1.bf16.msra.mxu0 %v519
  %541 = vmatprep.subr.bf16.mxu0 0
  %542 = vmatpush1.bf16.msra.mxu0 %v520
  %543 = vmatprep.subr.bf16.mxu0 0
  %544 = vmatpush1.bf16.msra.mxu0 %v521
  %545 = vmatprep.subr.bf16.mxu0 0
  %546 = vmatpush1.bf16.msra.mxu0 %v522
  %547 = vmatprep.subr.bf16.mxu0 0
  %548 = vmatpush1.bf16.msra.mxu0 0
  %549 = vmatprep.subr.bf16.mxu0 0
  %550 = vmatpush1.bf16.msra.mxu0 0
  %551 = vmatprep.subr.bf16.mxu0 0
  %552 = vmatpush1.bf16.msra.mxu0 0
  %553 = vmatprep.subr.bf16.mxu0 0
  %554 = vmatpush1.bf16.msra.mxu0 0
  %555 = vmatprep.subr.bf16.mxu0 0
  %556 = vmatpush1.bf16.msra.mxu0 0
  %557 = vmatprep.subr.bf16.mxu0 0
  %558 = vmatpush1.bf16.msra.mxu0 0
  %559 = vmatprep.subr.bf16.mxu0 0
  %560 = vmatpush1.bf16.msra.mxu0 0
  %561 = vmatprep.subr.bf16.mxu0 0
  %562 = vmatpush1.bf16.msra.mxu0 0
  %563 = vmatprep.mubr.bf16.mxu0 0
  %564 = vmatmul.mubr.bf16.gmra.mrb[0].mxu0 %v459
  %v565 = vpop.f32.mrb[0].mxu0
  %v566 = vadd.f32 %v481, %v565
  %v567 = vpop.f32.mrb[0].mxu0
  %v568 = vpop.f32.mrb[0].mxu0
  %v569 = vadd.f32 %v481, %v568
  %v570 = vpop.f32.mrb[0].mxu0
  %571 = vdwg.mxu0
  %v572 = vadd.f32 %v338, %v566
  %v573 = vadd.f32 %v341, %v569
  %574 = vst [vmem:[%s11] sm:$0xff] %v572
  %575 = vst [vmem:[%s11 + $0x8] sm:$0xff] %v573
  // Predicated region
  $region46: #{concept_encoder_forward.1} parent=0 // pred_check
    _
  $region47: #{concept_encoder_forward.1} parent=0 // pred_check_branch
    %577 = sbr.rel (0) target = $region49
  $region48: #{concept_encoder_forward.1} parent=0 // pred_region
    _
  $region49: #{concept_encoder_forward.1} parent=0 // pred_fallthru
    _
  // Predicated region
  $region50: #{concept_encoder_forward.1} parent=0 // pred_check
    _
  $region51: #{concept_encoder_forward.1} parent=0 // pred_check_branch
    %579 = sbr.rel (0) target = $region53
  $region52: #{concept_encoder_forward.1} parent=0 // pred_region
    _
  $region53: #{concept_encoder_forward.1} parent=0 // pred_fallthru
    _

</llo_original>
